<compile_context>
chip_gen: v6e
topology: v6e:2x2x1
jax: 0.10.0
libtpu: 0.0.40
codegen_flags: <defaults>
</compile_context>

<pallas_src>
import functools

import jax
import jax.numpy as jnp
from jax.experimental import pallas as pl
from jax.experimental.pallas import tpu as pltpu


def _concat_dma_kernel(sizes, offsets, num_shards, *refs):
    """HBM->HBM channel concat.

    refs = (*in_hbm_refs, out_hbm_ref, sem)
      in_hbm_refs[i] : (N, sizes[i])   flattened feature i, in HBM
      out_hbm_ref    : (N, sum(sizes)) flattened concatenated output, in HBM
      sem            : DMA semaphores, one per input

    Grid axis 0 shards the inputs across programs (-> across TensorCores on
    v7x when marked "parallel").  Each program starts every DMA it owns before
    waiting on any of them so the copy engines overlap.
    """
    *in_refs, out_ref, sem = refs
    shard = pl.program_id(0)

    # Phase 1: start all copies owned by this shard.
    for idx, (r, off, sz) in enumerate(zip(in_refs, offsets, sizes)):
        def _start(r=r, off=off, sz=sz, idx=idx):
            pltpu.make_async_copy(
                r, out_ref.at[:, off:off + sz], sem.at[idx]).start()
        pl.when(shard == idx % num_shards)(_start)

    # Phase 2: wait on the same copies (re-building the descriptor is fine:
    # the wait only needs the matching semaphore / transfer size).
    for idx, (r, off, sz) in enumerate(zip(in_refs, offsets, sizes)):
        def _wait(r=r, off=off, sz=sz, idx=idx):
            pltpu.make_async_copy(
                r, out_ref.at[:, off:off + sz], sem.at[idx]).wait()
        pl.when(shard == idx % num_shards)(_wait)


def feature_concat(layers, x, outputs, *, min_pallas_bytes=1 << 20):
    """Pallas equivalent of FeatureConcat.forward(x, outputs).

    `x` is unused by the PyTorch forward (kept for signature parity).
    `min_pallas_bytes`: below this output size, use XLA's native concat
    (launch/DMA-issue overhead would dominate a Pallas copy kernel).
    """
    del x
    feats = [outputs[i] for i in layers]

    if len(feats) == 1:
        # multiple == False path: identity pass-through (no compute to kernelize)
        return feats[0]

    n, _, h, w = feats[0].shape
    dtype = feats[0].dtype
    # Explicit consistency checks (silent mismatch would otherwise mis-write).
    for f in feats:
        if f.ndim != 4 or f.shape[0] != n or f.shape[2] != h or f.shape[3] != w:
            raise ValueError(
                f"FeatureConcat: all selected outputs must share (N, H, W); "
                f"got {f.shape} vs {(n, '*', h, w)}")
        if f.dtype != dtype:
            raise ValueError(
                f"FeatureConcat: dtype mismatch {f.dtype} vs {dtype}")

    total_c = int(sum(f.shape[1] for f in feats))

    # Skip zero-channel inputs: they contribute nothing and would otherwise
    # issue zero-byte DMAs.
    nz_feats = [f for f in feats if f.shape[1] > 0]
    if len(nz_feats) <= 1:
        return jnp.concatenate(feats, axis=1)

    # Flatten (C, H, W) per batch element: metadata-only for default
    # (row-major NCHW) layout; each per-batch destination window becomes a
    # single contiguous C_i*H*W run.
    sizes = tuple(int(f.shape[1]) * h * w for f in nz_feats)
    offsets = tuple(int(sum(sizes[:i])) for i in range(len(sizes)))
    total = int(sum(sizes))
    itemsize = jnp.dtype(dtype).itemsize

    # Small-size fallback: tiny feature maps are dominated by launch overhead.
    if n * total * itemsize < min_pallas_bytes:
        return jnp.concatenate(feats, axis=1)

    flat_feats = [f.reshape(n, -1) for f in nz_feats]

    # Up to 2 shards so v7x can issue DMAs from both TensorCores; on v5e/v6e
    # the (tiny) grid just iterates sequentially on the single core.
    num_shards = min(2, len(flat_feats))

    kernel = functools.partial(_concat_dma_kernel, sizes, offsets, num_shards)

    out_flat = pl.pallas_call(
        kernel,
        out_shape=jax.ShapeDtypeStruct((n, total), dtype),
        grid=(num_shards,),
        # Keep everything in HBM: the kernel only issues DMAs, no VMEM tiles.
        in_specs=[pl.BlockSpec(memory_space=pl.ANY) for _ in flat_feats],
        out_specs=pl.BlockSpec(memory_space=pl.ANY),
        scratch_shapes=[pltpu.SemaphoreType.DMA((len(flat_feats),))],
        compiler_params=pltpu.CompilerParams(
            dimension_semantics=("parallel",),
            vmem_limit_bytes=8 << 20,  # kernel uses ~no scoped VMEM
        ),
        cost_estimate=pl.CostEstimate(
            flops=0,
            transcendentals=0,
            bytes_accessed=2 * n * total * itemsize,  # read + write
        ),
    )(*flat_feats)

    return out_flat.reshape(n, total_c, h, w)


if __name__ == "__main__":
    key = jax.random.PRNGKey(0)
    k0, k1, k2, kx = jax.random.split(key, 4)

    N, H, W = 2, 16, 16
    # "outputs": previously computed feature maps with differing channel counts
    outputs = [
        jax.random.normal(k0, (N, 4, H, W), jnp.float32),
        jax.random.normal(k1, (N, 6, H, W), jnp.float32),
        jax.random.normal(k2, (N, 2, H, W), jnp.float32),
    ]
    x = jax.random.normal(kx, (N, 4, H, W), jnp.float32)  # unused, as in PyTorch

    # Multi-layer concat, forcing the Pallas DMA path (these shapes are below
    # the default small-size fallback threshold).
    layers = [0, 1, 2]
    y = jax.block_until_ready(
        feature_concat(layers, x, outputs, min_pallas_bytes=0))
    ref = jnp.concatenate([outputs[i] for i in layers], axis=1)
    assert y.shape == (N, 12, H, W)
    assert y.dtype == jnp.float32
    assert jnp.array_equal(y, ref), "concat mismatch vs reference"

    # Different ordering (exercises per-input offsets), Pallas path.
    layers2 = [2, 0]
    y2 = jax.block_until_ready(
        feature_concat(layers2, x, outputs, min_pallas_bytes=0))
    ref2 = jnp.concatenate([outputs[i] for i in layers2], axis=1)
    assert jnp.array_equal(y2, ref2), "reordered concat mismatch"

    # Default call: small inputs take the jnp.concatenate fallback path.
    y_small = jax.block_until_ready(feature_concat(layers, x, outputs))
    assert jnp.array_equal(y_small, ref), "small-size fallback mismatch"

    # Single-layer (pass-through) path.
    y1 = jax.block_until_ready(feature_concat([1], x, outputs))
    assert jnp.array_equal(y1, outputs[1]), "single-layer mismatch"

    print("KERNEL_OK")
</pallas_src>

<mosaic_0001>
module attributes {stable_mosaic.version = 11 : i64} {
  func.func @_concat_dma_kernel(%arg0: i32, %arg1: memref<2x1024xf32, #tpu.memory_space<any>>, %arg2: memref<2x1536xf32, #tpu.memory_space<any>>, %arg3: memref<2x512xf32, #tpu.memory_space<any>>, %arg4: memref<2x3072xf32, #tpu.memory_space<any>>, %arg5: memref<3x!tpu.dma_semaphore, #tpu.memory_space<semaphore_mem>>) attributes {dimension_semantics = [#tpu.dimension_semantics<parallel>], iteration_bounds = array<i64: 2>, scalar_prefetch = 0 : i64, scratch_operands = 1 : i64, tpu.core_type = #tpu.core_type<tc>, window_params = [{}, {}, {}, {}]} {
    %c0_i32 = arith.constant 0 : i32
    %0 = arith.cmpi eq, %arg0, %c0_i32 : i32
    %1 = arith.extui %0 : i1 to i32
    %c0_i32_0 = arith.constant 0 : i32
    %2 = arith.cmpi ne, %1, %c0_i32_0 : i32
    scf.if %2 {
      %c0_i32_10 = arith.constant 0 : i32
      %c0_i32_11 = arith.constant 0 : i32
      %c0_i32_12 = arith.constant 0 : i32
      %18 = tpu.memref_slice %arg4[%c0_i32_11, %c0_i32_12] : memref<2x3072xf32, #tpu.memory_space<any>> -> memref<2x1024xf32, #tpu.memory_space<any>>
      %19 = tpu.memref_slice %arg5[%c0_i32_10] : memref<3x!tpu.dma_semaphore, #tpu.memory_space<semaphore_mem>> -> memref<1x!tpu.dma_semaphore, #tpu.memory_space<semaphore_mem>>
      %20 = tpu.memref_squeeze %19 : memref<1x!tpu.dma_semaphore, #tpu.memory_space<semaphore_mem>> -> memref<!tpu.dma_semaphore, #tpu.memory_space<semaphore_mem>>
      tpu.enqueue_dma source(%arg1 : memref<2x1024xf32, #tpu.memory_space<any>>) target(%18 : memref<2x1024xf32, #tpu.memory_space<any>>) target_semaphore(%20 : memref<!tpu.dma_semaphore, #tpu.memory_space<semaphore_mem>>)
    } else {
    }
    %c1_i32 = arith.constant 1 : i32
    %3 = arith.cmpi eq, %arg0, %c1_i32 : i32
    %4 = arith.extui %3 : i1 to i32
    %c0_i32_1 = arith.constant 0 : i32
    %5 = arith.cmpi ne, %4, %c0_i32_1 : i32
    scf.if %5 {
      %c1_i32_10 = arith.constant 1 : i32
      %c0_i32_11 = arith.constant 0 : i32
      %c1024_i32 = arith.constant 1024 : i32
      %18 = tpu.memref_slice %arg4[%c0_i32_11, %c1024_i32] : memref<2x3072xf32, #tpu.memory_space<any>> -> memref<2x1536xf32, #tpu.memory_space<any>>
      %19 = tpu.memref_slice %arg5[%c1_i32_10] : memref<3x!tpu.dma_semaphore, #tpu.memory_space<semaphore_mem>> -> memref<1x!tpu.dma_semaphore, #tpu.memory_space<semaphore_mem>>
      %20 = tpu.memref_squeeze %19 : memref<1x!tpu.dma_semaphore, #tpu.memory_space<semaphore_mem>> -> memref<!tpu.dma_semaphore, #tpu.memory_space<semaphore_mem>>
      tpu.enqueue_dma source(%arg2 : memref<2x1536xf32, #tpu.memory_space<any>>) target(%18 : memref<2x1536xf32, #tpu.memory_space<any>>) target_semaphore(%20 : memref<!tpu.dma_semaphore, #tpu.memory_space<semaphore_mem>>)
    } else {
    }
    %c0_i32_2 = arith.constant 0 : i32
    %6 = arith.cmpi eq, %arg0, %c0_i32_2 : i32
    %7 = arith.extui %6 : i1 to i32
    %c0_i32_3 = arith.constant 0 : i32
    %8 = arith.cmpi ne, %7, %c0_i32_3 : i32
    scf.if %8 {
      %c2_i32 = arith.constant 2 : i32
      %c0_i32_10 = arith.constant 0 : i32
      %c2560_i32 = arith.constant 2560 : i32
      %18 = tpu.memref_slice %arg4[%c0_i32_10, %c2560_i32] : memref<2x3072xf32, #tpu.memory_space<any>> -> memref<2x512xf32, #tpu.memory_space<any>>
      %19 = tpu.memref_slice %arg5[%c2_i32] : memref<3x!tpu.dma_semaphore, #tpu.memory_space<semaphore_mem>> -> memref<1x!tpu.dma_semaphore, #tpu.memory_space<semaphore_mem>>
      %20 = tpu.memref_squeeze %19 : memref<1x!tpu.dma_semaphore, #tpu.memory_space<semaphore_mem>> -> memref<!tpu.dma_semaphore, #tpu.memory_space<semaphore_mem>>
      tpu.enqueue_dma source(%arg3 : memref<2x512xf32, #tpu.memory_space<any>>) target(%18 : memref<2x512xf32, #tpu.memory_space<any>>) target_semaphore(%20 : memref<!tpu.dma_semaphore, #tpu.memory_space<semaphore_mem>>)
    } else {
    }
    %c0_i32_4 = arith.constant 0 : i32
    %9 = arith.cmpi eq, %arg0, %c0_i32_4 : i32
    %10 = arith.extui %9 : i1 to i32
    %c0_i32_5 = arith.constant 0 : i32
    %11 = arith.cmpi ne, %10, %c0_i32_5 : i32
    scf.if %11 {
      %c0_i32_10 = arith.constant 0 : i32
      %c0_i32_11 = arith.constant 0 : i32
      %c0_i32_12 = arith.constant 0 : i32
      %18 = tpu.memref_slice %arg4[%c0_i32_11, %c0_i32_12] : memref<2x3072xf32, #tpu.memory_space<any>> -> memref<2x1024xf32, #tpu.memory_space<any>>
      %19 = tpu.memref_slice %arg5[%c0_i32_10] : memref<3x!tpu.dma_semaphore, #tpu.memory_space<semaphore_mem>> -> memref<1x!tpu.dma_semaphore, #tpu.memory_space<semaphore_mem>>
      %20 = tpu.memref_squeeze %19 : memref<1x!tpu.dma_semaphore, #tpu.memory_space<semaphore_mem>> -> memref<!tpu.dma_semaphore, #tpu.memory_space<semaphore_mem>>
      tpu.wait_dma2 semaphore(%20 : memref<!tpu.dma_semaphore, #tpu.memory_space<semaphore_mem>>) src(%arg1 : memref<2x1024xf32, #tpu.memory_space<any>>) dst(%18 : memref<2x1024xf32, #tpu.memory_space<any>>)
    } else {
    }
    %c1_i32_6 = arith.constant 1 : i32
    %12 = arith.cmpi eq, %arg0, %c1_i32_6 : i32
    %13 = arith.extui %12 : i1 to i32
    %c0_i32_7 = arith.constant 0 : i32
    %14 = arith.cmpi ne, %13, %c0_i32_7 : i32
    scf.if %14 {
      %c1_i32_10 = arith.constant 1 : i32
      %c0_i32_11 = arith.constant 0 : i32
      %c1024_i32 = arith.constant 1024 : i32
      %18 = tpu.memref_slice %arg4[%c0_i32_11, %c1024_i32] : memref<2x3072xf32, #tpu.memory_space<any>> -> memref<2x1536xf32, #tpu.memory_space<any>>
      %19 = tpu.memref_slice %arg5[%c1_i32_10] : memref<3x!tpu.dma_semaphore, #tpu.memory_space<semaphore_mem>> -> memref<1x!tpu.dma_semaphore, #tpu.memory_space<semaphore_mem>>
      %20 = tpu.memref_squeeze %19 : memref<1x!tpu.dma_semaphore, #tpu.memory_space<semaphore_mem>> -> memref<!tpu.dma_semaphore, #tpu.memory_space<semaphore_mem>>
      tpu.wait_dma2 semaphore(%20 : memref<!tpu.dma_semaphore, #tpu.memory_space<semaphore_mem>>) src(%arg2 : memref<2x1536xf32, #tpu.memory_space<any>>) dst(%18 : memref<2x1536xf32, #tpu.memory_space<any>>)
    } else {
    }
    %c0_i32_8 = arith.constant 0 : i32
    %15 = arith.cmpi eq, %arg0, %c0_i32_8 : i32
    %16 = arith.extui %15 : i1 to i32
    %c0_i32_9 = arith.constant 0 : i32
    %17 = arith.cmpi ne, %16, %c0_i32_9 : i32
    scf.if %17 {
      %c2_i32 = arith.constant 2 : i32
      %c0_i32_10 = arith.constant 0 : i32
      %c2560_i32 = arith.constant 2560 : i32
      %18 = tpu.memref_slice %arg4[%c0_i32_10, %c2560_i32] : memref<2x3072xf32, #tpu.memory_space<any>> -> memref<2x512xf32, #tpu.memory_space<any>>
      %19 = tpu.memref_slice %arg5[%c2_i32] : memref<3x!tpu.dma_semaphore, #tpu.memory_space<semaphore_mem>> -> memref<1x!tpu.dma_semaphore, #tpu.memory_space<semaphore_mem>>
      %20 = tpu.memref_squeeze %19 : memref<1x!tpu.dma_semaphore, #tpu.memory_space<semaphore_mem>> -> memref<!tpu.dma_semaphore, #tpu.memory_space<semaphore_mem>>
      tpu.wait_dma2 semaphore(%20 : memref<!tpu.dma_semaphore, #tpu.memory_space<semaphore_mem>>) src(%arg3 : memref<2x512xf32, #tpu.memory_space<any>>) dst(%18 : memref<2x512xf32, #tpu.memory_space<any>>)
    } else {
    }
    return
  }
}

</mosaic_0001>

<llo_original>
// kernel: tpu_custom_call.1
$region0: #{tpu_custom_call.1}
  #allocation0 [shape = 'u32[]', space=smem, size = 0x4, offset = 0x4, fixed_abs, tag = 'smem constant byte address 0x4 - core index']
  #allocation1 [shape = 'u32[144,128]{1,0:T(1,128)}', space=vmem, size = 0x12000, scoped, tag = 'internal scratch']
  #allocation2 [shape = 's32[3]{0}', space=sflag, size = 0xc, scoped, tag = 'scratch operand']
  #allocation3 [shape = 's32[]', space=sflag, size = 0x4, offset = 0, fixed_abs, tag = 'sflag constant byte address 0x0 - dummy sync flag']
  #allocation4 [shape = 'u32[0]{0}', space=smem, size = 0, offset = 0, fixed_abs, tag = 'smem constant byte address 0x0 - null']
  #allocation5 [shape = 's32[]', space=sflag, size = 0x4, offset = 0, fixed_abs, tag = 'sflag constant byte address 0x0 - dummy sync flag']
  #allocation6 [shape = 'u32[0]{0}', space=smem, size = 0, offset = 0, fixed_abs, tag = 'smem constant byte address 0x0 - null']
  #allocation7 [shape = 's32[]', space=sflag, size = 0x4, offset = 0, fixed_abs, tag = 'sflag constant byte address 0x0 - dummy sync flag']
  #allocation8 [shape = 'u32[0]{0}', space=smem, size = 0, offset = 0, fixed_abs, tag = 'smem constant byte address 0x0 - null']
  %s0 = inlined_call_operand.hbm [shape: f32[2,1024], index: 0, kind: input, shape index: {}]
  %s1 = inlined_call_operand.hbm [shape: f32[2,1536], index: 1, kind: input, shape index: {}]
  %s2 = inlined_call_operand.hbm [shape: f32[2,512], index: 2, kind: input, shape index: {}]
  %s3 = inlined_call_operand.hbm [shape: f32[2,3072], index: 3, kind: output, shape index: {}]
  %s4 = sld [smem:[#allocation0]]
  $region29: #{tpu_custom_call.1} parent=0
    _
  %s6 = ssub.s32 1, %s4
  %s7 = scalar_select 0, %s6, %s4
  loop: start=0, step=1, limit=2
  $region2: #{tpu_custom_call.1} parent=0 // loop_pre_header
    _
  $region3: #{tpu_custom_call.1} parent=0 // loop_header
    %s9 = sphi 0, %s13
    %p10 = scmp.ge.s32.totalorder %s9, 2
  $region4: #{tpu_custom_call.1} parent=0 // loop_header_branch
    %12 = sbr.rel (%p10) target = $region8
  $region5: #{tpu_custom_call.1} parent=0 // loop_body
    %s14 = sadd.s32 %s9, 1
    %p15 = scmp.eq.s32.totalorder %s9, 0
    // Predicated region
    $region9: #{tpu_custom_call.1} parent=5 // pred_check
      %p16 = pneg %p15
    $region10: #{tpu_custom_call.1} parent=5 // pred_check_branch
      %18 = sbr.rel (%p16) target = $region12
    $region11: #{tpu_custom_call.1} parent=5 // pred_region
      %s20 = sshll.u32 1, 14
      %s21 = sxor.u32 4294967295, %s20
      %25 = dma.general %s0, 256, %s3, [#allocation2], 131072, [#allocation4], 0, 0
    $region12: #{tpu_custom_call.1} parent=5 // pred_fallthru
      _
    %p26 = scmp.eq.s32.totalorder %s9, 1
    // Predicated region
    $region13: #{tpu_custom_call.1} parent=5 // pred_check
      %p27 = pneg %p26
    $region14: #{tpu_custom_call.1} parent=5 // pred_check_branch
      %29 = sbr.rel (%p27) target = $region16
    $region15: #{tpu_custom_call.1} parent=5 // pred_region
      %s30 = scalar_lea.hbm %s3, 256
      %s31 = scalar_lea.sflag [#allocation2], 1
      %s33 = sshll.u32 1, 14
      %s34 = sxor.u32 4294967295, %s33
      %38 = dma.general %s1, 384, %s30, %s31, 131072, [#allocation6], 0, 0
    $region16: #{tpu_custom_call.1} parent=5 // pred_fallthru
      _
    // Predicated region
    $region17: #{tpu_custom_call.1} parent=5 // pred_check
      %p39 = pneg %p15
    $region18: #{tpu_custom_call.1} parent=5 // pred_check_branch
      %41 = sbr.rel (%p39) target = $region20
    $region19: #{tpu_custom_call.1} parent=5 // pred_region
      %s42 = scalar_lea.hbm %s3, 640
      %s43 = scalar_lea.sflag [#allocation2], 2
      %s45 = sshll.u32 1, 14
      %s46 = sxor.u32 4294967295, %s45
      %50 = dma.general %s2, 128, %s42, %s43, 131072, [#allocation8], 0, 0
      %s51 = smul.u32 2, 1
      %s52 = smul.u32 %s51, 8
      %s53 = sshll.u32 %s52, 4
      %54 = dma.done [#allocation2], %s53
    $region20: #{tpu_custom_call.1} parent=5 // pred_fallthru
      _
    // Predicated region
    $region21: #{tpu_custom_call.1} parent=5 // pred_check
      %p55 = pneg %p26
    $region22: #{tpu_custom_call.1} parent=5 // pred_check_branch
      %57 = sbr.rel (%p55) target = $region24
    $region23: #{tpu_custom_call.1} parent=5 // pred_region
      %s58 = scalar_lea.sflag [#allocation2], 1
      %s59 = smul.u32 2, 1
      %s60 = smul.u32 %s59, 12
      %s61 = sshll.u32 %s60, 4
      %62 = dma.done %s58, %s61
    $region24: #{tpu_custom_call.1} parent=5 // pred_fallthru
      _
    // Predicated region
    $region25: #{tpu_custom_call.1} parent=5 // pred_check
      %p63 = pneg %p15
    $region26: #{tpu_custom_call.1} parent=5 // pred_check_branch
      %65 = sbr.rel (%p63) target = $region28
    $region27: #{tpu_custom_call.1} parent=5 // pred_region
      %s66 = scalar_lea.sflag [#allocation2], 2
      %s67 = smul.u32 2, 1
      %s68 = smul.u32 %s67, 4
      %s69 = sshll.u32 %s68, 4
      %70 = dma.done %s66, %s69
    $region28: #{tpu_custom_call.1} parent=5 // pred_fallthru
      _
  $region6: #{tpu_custom_call.1} parent=0 // loop_footer
    %s13 = sadd.s32 1, %s9
  $region7: #{tpu_custom_call.1} parent=0 // loop_footer_branch
    %8 = sbr.rel target = $region3
  $region8: #{tpu_custom_call.1} parent=0 // loop_exit
    _
  %71 = vsyncmov [#allocation2]
  %s72 = vpop.sfrf %71
  %p73 = scmp.eq.s32.totalorder %s72, 0
  %p74 = pneg %p73
  %76 = shalt.err (%p74)
  %s77 = scalar_lea.sflag [#allocation2], 1
  %78 = vsyncmov %s77
  %s79 = vpop.sfrf %78
  %p80 = scmp.eq.s32.totalorder %s79, 0
  %p81 = pneg %p80
  %83 = shalt.err (%p81)
  %s84 = scalar_lea.sflag [#allocation2], 2
  %85 = vsyncmov %s84
  %s86 = vpop.sfrf %85
  %p87 = scmp.eq.s32.totalorder %s86, 0
  %p88 = pneg %p87
  %90 = shalt.err (%p88)

</llo_original>
